<compile_context>
chip_gen: v6e
topology: v6e:2x2x1
jax: 0.10.0
libtpu: 0.0.40
codegen_flags: <defaults>
</compile_context>

<pallas_src>
import jax
import jax.numpy as jnp
from jax.experimental import pallas as pl
from jax.experimental.pallas import tpu as pltpu


def _round_up(v, m):
    return ((v + m - 1) // m) * m


# ---------------------------------------------------------------------------
# Kernel A: pre-fused weight (w1 = w * base_w computed once in the wrapper).
#   o = x @ w1 + b
# ---------------------------------------------------------------------------
def _matmul_bias_kernel(x_ref, w_ref, b_ref, o_ref, acc_ref):
    k = pl.program_id(2)

    @pl.when(k == 0)
    def _():
        acc_ref[...] = jnp.zeros_like(acc_ref)

    acc_ref[...] += jnp.dot(x_ref[...], w_ref[...],
                            preferred_element_type=jnp.float32)

    @pl.when(k == pl.num_programs(2) - 1)
    def _():
        o_ref[...] = (acc_ref[...] + b_ref[...].astype(jnp.float32)).astype(o_ref.dtype)


# ---------------------------------------------------------------------------
# Kernel B: in-kernel fused meta mask (used when each weight tile is streamed
# at most ~2x, so reading both w and base_w beats an extra HBM round trip).
#   o = x @ (w * base_w) + b
# ---------------------------------------------------------------------------
def _meta_matmul_bias_kernel(x_ref, w_ref, bw_ref, b_ref, o_ref, acc_ref):
    k = pl.program_id(2)

    @pl.when(k == 0)
    def _():
        acc_ref[...] = jnp.zeros_like(acc_ref)

    w1 = w_ref[...] * bw_ref[...]            # VPU elementwise, fused with MXU matmul
    acc_ref[...] += jnp.dot(x_ref[...], w1, preferred_element_type=jnp.float32)

    @pl.when(k == pl.num_programs(2) - 1)
    def _():
        o_ref[...] = (acc_ref[...] + b_ref[...].astype(jnp.float32)).astype(o_ref.dtype)


def meta_linear(x, w, base_w, b, *, tm=None, tn=None, tk=None, compute_dtype=None):
    """Pallas implementation of LinearForMeta_sc.forward(x, w).

    x:      (..., in_dim)
    w:      (in_dim, out_dim)   -- meta mask, multiplied elementwise with base_w
    base_w: (in_dim, out_dim)
    b:      (out_dim,)
    compute_dtype: optional (e.g. jnp.bfloat16) dtype for the streamed matmul
        operands; accumulation stays f32. Default: x.dtype.
    returns (..., out_dim) in x.dtype
    """
    *lead, K = x.shape
    N = base_w.shape[1]
    M = 1
    for d in lead:
        M *= d

    out_dtype = x.dtype
    compute_dtype = jnp.dtype(compute_dtype) if compute_dtype is not None else jnp.dtype(x.dtype)

    # --- tile selection: (8,128)-aligned, capped so the grid actually pipelines
    #     and megacore can shard the parallel axes, but never exceeding the
    #     (padded) array extents for tiny problems. ---
    tm = _round_up(tm if tm is not None else min(256, _round_up(M, 8)), 8)
    tk = _round_up(tk if tk is not None else min(512, _round_up(K, 128)), 128)
    tn = _round_up(tn if tn is not None else min(256, _round_up(N, 128)), 128)

    M_pad = _round_up(M, tm)
    K_pad = _round_up(K, tk)
    N_pad = _round_up(N, tn)
    grid = (M_pad // tm, N_pad // tn, K_pad // tk)
    grid_m = grid[0]

    # --- zero-pad operands up to the tile grid (zero K/N padding keeps results
    #     exact; padded M rows / N cols are sliced off afterwards). Padding to a
    #     lane-dense (multiple-of-128) N also keeps the output stores unmasked. ---
    x2d = x.reshape(M, K)
    if (M_pad, K_pad) != (M, K):
        x2d = jnp.pad(x2d, ((0, M_pad - M), (0, K_pad - K)))
    x2d = x2d.astype(compute_dtype)

    b2d = b.reshape(1, N).astype(jnp.float32)
    if N_pad != N:
        b2d = jnp.pad(b2d, ((0, 0), (0, N_pad - N)))

    def _pad_w(a):
        if (K_pad, N_pad) != (K, N):
            a = jnp.pad(a, ((0, K_pad - K), (0, N_pad - N)))
        return a

    # Pre-fuse the meta mask when each weight tile would otherwise be streamed
    # (and multiplied) more than ~2x across M tiles, or when the matmul runs in
    # reduced precision (the w * base_w product is then still formed in f32).
    prefuse = (grid_m > 2) or (compute_dtype != jnp.dtype(jnp.float32))

    # --- explicit VMEM budget: double-buffered streams + f32 accumulator ---
    itemsize = compute_dtype.itemsize
    n_w_streams = 1 if prefuse else 2
    vmem_bytes = (
        2 * (tm * tk + n_w_streams * tk * tn + tm * tn) * itemsize
        + tm * tn * 4          # f32 accumulator scratch
        + 2 * tn * 4           # bias
    )
    vmem_limit = int(min(max(2 * vmem_bytes, 16 << 20), 64 << 20))

    cp = pltpu.CompilerParams(
        dimension_semantics=("parallel", "parallel", "arbitrary"),
        vmem_limit_bytes=vmem_limit,
    )

    out_shape = jax.ShapeDtypeStruct((M_pad, N_pad), out_dtype)
    x_spec = pl.BlockSpec((tm, tk), lambda i, j, k: (i, k))
    w_spec = pl.BlockSpec((tk, tn), lambda i, j, k: (k, j))
    b_spec = pl.BlockSpec((1, tn), lambda i, j, k: (0, j))
    o_spec = pl.BlockSpec((tm, tn), lambda i, j, k: (i, j))
    scratch = [pltpu.VMEM((tm, tn), jnp.float32)]

    if prefuse:
        # One-shot elementwise fuse in f32 (plain XLA op), then cast for the MXU:
        # halves weight HBM traffic and drops one double-buffered VMEM stream.
        w1 = _pad_w(w.astype(jnp.float32) * base_w.astype(jnp.float32)).astype(compute_dtype)
        out2d = pl.pallas_call(
            _matmul_bias_kernel,
            out_shape=out_shape,
            grid_spec=pltpu.PrefetchScalarGridSpec(
                num_scalar_prefetch=0,
                grid=grid,
                in_specs=[x_spec, w_spec, b_spec],
                out_specs=o_spec,
                scratch_shapes=scratch,
            ),
            compiler_params=cp,
        )(x2d, w1, b2d)
    else:
        wp = _pad_w(w).astype(compute_dtype)
        bwp = _pad_w(base_w).astype(compute_dtype)
        out2d = pl.pallas_call(
            _meta_matmul_bias_kernel,
            out_shape=out_shape,
            grid_spec=pltpu.PrefetchScalarGridSpec(
                num_scalar_prefetch=0,
                grid=grid,
                in_specs=[x_spec, w_spec, w_spec, b_spec],
                out_specs=o_spec,
                scratch_shapes=scratch,
            ),
            compiler_params=cp,
        )(x2d, wp, bwp, b2d)

    return out2d[:M, :N].reshape(*lead, N)


def init_params(key, in_dim, out_dim):
    """Deterministic init matching the PyTorch module:
       base_w ~ xavier_normal (std = sqrt(2/(fan_in+fan_out)))
       b      ~ normal(std=0.01)
    """
    k_bw, k_b = jax.random.split(key)
    xavier_std = (2.0 / (in_dim + out_dim)) ** 0.5
    base_w = jax.random.normal(k_bw, (in_dim, out_dim), jnp.float32) * xavier_std
    b = jax.random.normal(k_b, (out_dim,), jnp.float32) * 0.01
    return base_w, b


if __name__ == "__main__":
    key = jax.random.PRNGKey(0)
    k_p1, k_x1, k_w1, k_p2, k_x2, k_w2 = jax.random.split(key, 6)

    # --- small demo at the module's natural shapes (in-kernel fused path) ---
    batch, seq, in_dim, out_dim = 2, 8, 32, 32
    base_w, b = init_params(k_p1, in_dim, out_dim)
    x = jax.random.normal(k_x1, (batch, seq, in_dim), jnp.float32)
    w = jax.random.normal(k_w1, (in_dim, out_dim), jnp.float32)

    out = jax.block_until_ready(meta_linear(x, w, base_w, b))
    ref = jnp.matmul(x, w * base_w) + b
    assert out.shape == (batch, seq, out_dim)
    assert jnp.allclose(out, ref, atol=1e-5, rtol=1e-5)

    # --- larger shape exercising padding + the pre-fused multi-tile pipeline ---
    b2, s2, k2, n2 = 4, 200, 320, 200
    base_w2, bias2 = init_params(k_p2, k2, n2)
    x_big = jax.random.normal(k_x2, (b2, s2, k2), jnp.float32)
    w_big = jax.random.normal(k_w2, (k2, n2), jnp.float32)

    out_big = jax.block_until_ready(meta_linear(x_big, w_big, base_w2, bias2))
    ref_big = jnp.matmul(x_big, w_big * base_w2,
                         precision=jax.lax.Precision.HIGHEST) + bias2
    assert out_big.shape == (b2, s2, n2)
    assert jnp.allclose(out_big, ref_big, atol=1e-3, rtol=1e-3)

    print("KERNEL_OK")
</pallas_src>

<mosaic_0001>
module attributes {stable_mosaic.version = 11 : i64} {
  func.func @_meta_matmul_bias_kernel(%arg0: i32, %arg1: i32, %arg2: i32, %arg3: memref<16x128xf32, #tpu.memory_space<vmem>>, %arg4: memref<128x128xf32, #tpu.memory_space<vmem>>, %arg5: memref<128x128xf32, #tpu.memory_space<vmem>>, %arg6: memref<1x128xf32, #tpu.memory_space<vmem>>, %arg7: memref<16x128xf32, #tpu.memory_space<vmem>>, %arg8: memref<16x128xf32, #tpu.memory_space<vmem>>) attributes {dimension_semantics = [#tpu.dimension_semantics<parallel>, #tpu.dimension_semantics<parallel>, #tpu.dimension_semantics<arbitrary>], iteration_bounds = array<i64: 1, 1, 1>, scalar_prefetch = 0 : i64, scratch_operands = 1 : i64, tpu.core_type = #tpu.core_type<tc>, window_params = [{transform_indices = @transform_0, window_bounds = array<i64: 16, 128>}, {transform_indices = @transform_1, window_bounds = array<i64: 128, 128>}, {transform_indices = @transform_2, window_bounds = array<i64: 128, 128>}, {transform_indices = @transform_3, window_bounds = array<i64: 1, 128>}, {transform_indices = @transform_4, window_bounds = array<i64: 16, 128>}]} {
    %c0_i32 = arith.constant 0 : i32
    %0 = arith.cmpi eq, %arg2, %c0_i32 : i32
    %1 = arith.extui %0 : i1 to i32
    %c0_i32_0 = arith.constant 0 : i32
    %2 = arith.cmpi ne, %1, %c0_i32_0 : i32
    scf.if %2 {
      %cst_12 = arith.constant 0.000000e+00 : f32
      %14 = vector.broadcast %cst_12 : f32 to vector<16x128xf32>
      %c0_13 = arith.constant 0 : index
      %c0_14 = arith.constant 0 : index
      %15 = vector.load %arg8[%c0_13, %c0_14] : memref<16x128xf32, #tpu.memory_space<vmem>>, vector<16x128xf32>
      tpu.vector_store %arg8[%c0_13, %c0_14], %14 {strides = array<i32>} : memref<16x128xf32, #tpu.memory_space<vmem>>, vector<16x128xf32>,
    } else {
    }
    %c0 = arith.constant 0 : index
    %c0_1 = arith.constant 0 : index
    %3 = vector.load %arg4[%c0, %c0_1] : memref<128x128xf32, #tpu.memory_space<vmem>>, vector<128x128xf32>
    %c0_2 = arith.constant 0 : index
    %c0_3 = arith.constant 0 : index
    %4 = vector.load %arg5[%c0_2, %c0_3] : memref<128x128xf32, #tpu.memory_space<vmem>>, vector<128x128xf32>
    %5 = arith.mulf %3, %4 : vector<128x128xf32>
    %c0_4 = arith.constant 0 : index
    %c0_5 = arith.constant 0 : index
    %6 = vector.load %arg8[%c0_4, %c0_5] : memref<16x128xf32, #tpu.memory_space<vmem>>, vector<16x128xf32>
    %c0_6 = arith.constant 0 : index
    %c0_7 = arith.constant 0 : index
    %7 = vector.load %arg3[%c0_6, %c0_7] : memref<16x128xf32, #tpu.memory_space<vmem>>, vector<16x128xf32>
    %cst = arith.constant dense<0.000000e+00> : vector<16x128xf32>
    %8 = tpu.matmul %7, %5, %cst {dimension_numbers = #tpu.dot_dimension_numbers<[1], [0], [0], [1], [0, 0, 1, 1], [], []>} : vector<16x128xf32>, vector<128x128xf32>, vector<16x128xf32> -> vector<16x128xf32>
    %9 = arith.addf %6, %8 : vector<16x128xf32>
    %c0_8 = arith.constant 0 : index
    %c0_9 = arith.constant 0 : index
    %10 = vector.load %arg8[%c0_8, %c0_9] : memref<16x128xf32, #tpu.memory_space<vmem>>, vector<16x128xf32>
    tpu.vector_store %arg8[%c0_8, %c0_9], %9 {strides = array<i32>} : memref<16x128xf32, #tpu.memory_space<vmem>>, vector<16x128xf32>,
    %c0_i32_10 = arith.constant 0 : i32
    %11 = arith.cmpi eq, %arg2, %c0_i32_10 : i32
    %12 = arith.extui %11 : i1 to i32
    %c0_i32_11 = arith.constant 0 : i32
    %13 = arith.cmpi ne, %12, %c0_i32_11 : i32
    scf.if %13 {
      %c0_12 = arith.constant 0 : index
      %c0_13 = arith.constant 0 : index
      %14 = vector.load %arg8[%c0_12, %c0_13] : memref<16x128xf32, #tpu.memory_space<vmem>>, vector<16x128xf32>
      %c0_14 = arith.constant 0 : index
      %c0_15 = arith.constant 0 : index
      %15 = vector.load %arg6[%c0_14, %c0_15] : memref<1x128xf32, #tpu.memory_space<vmem>>, vector<1x128xf32>
      %16 = vector.broadcast %15 : vector<1x128xf32> to vector<16x128xf32>
      %17 = arith.addf %14, %16 : vector<16x128xf32>
      %c0_16 = arith.constant 0 : index
      %c0_17 = arith.constant 0 : index
      %18 = vector.load %arg7[%c0_16, %c0_17] : memref<16x128xf32, #tpu.memory_space<vmem>>, vector<16x128xf32>
      tpu.vector_store %arg7[%c0_16, %c0_17], %17 {strides = array<i32>} : memref<16x128xf32, #tpu.memory_space<vmem>>, vector<16x128xf32>,
    } else {
    }
    return
  }
  func.func @transform_0(%arg0: i32, %arg1: i32, %arg2: i32) -> (i32, i32) {
    %c0_i32 = arith.constant 0 : i32
    return %arg0, %arg2 : i32, i32
  }
  func.func @transform_1(%arg0: i32, %arg1: i32, %arg2: i32) -> (i32, i32) {
    %c0_i32 = arith.constant 0 : i32
    return %arg2, %arg1 : i32, i32
  }
  func.func @transform_2(%arg0: i32, %arg1: i32, %arg2: i32) -> (i32, i32) {
    %c0_i32 = arith.constant 0 : i32
    return %arg2, %arg1 : i32, i32
  }
  func.func @transform_3(%arg0: i32, %arg1: i32, %arg2: i32) -> (i32, i32) {
    %c0_i32 = arith.constant 0 : i32
    %c0_i32_0 = arith.constant 0 : i32
    return %c0_i32, %arg1 : i32, i32
  }
  func.func @transform_4(%arg0: i32, %arg1: i32, %arg2: i32) -> (i32, i32) {
    %c0_i32 = arith.constant 0 : i32
    return %arg0, %arg1 : i32, i32
  }
}

</mosaic_0001>

<llo_original>
// kernel: tpu_custom_call.1
$region0: #{tpu_custom_call.1}
  #allocation0 [shape = 'u32[]', space=smem, size = 0x4, offset = 0x4, fixed_abs, tag = 'smem constant byte address 0x4 - core index']
  #allocation1 [shape = 'u32[144,128]{1,0:T(1,128)}', space=vmem, size = 0x12000, scoped, tag = 'internal scratch']
  #allocation2 [shape = 'f32[16,128]{1,0:T(8,128)}', space=vmem, size = 0x2000, scoped, tag = 'scratch operand']
  %s0 = inlined_call_operand.hbm [shape: f32[16,128], index: 0, kind: input, shape index: {}]
  %s1 = inlined_call_operand.hbm [shape: f32[128,128], index: 1, kind: input, shape index: {}]
  %s2 = inlined_call_operand.hbm [shape: f32[128,128], index: 2, kind: input, shape index: {}]
  %s3 = inlined_call_operand.vmem [shape: f32[1,128], index: 3, kind: input, shape index: {}]
  %s4 = inlined_call_operand.hbm [shape: f32[16,128], index: 4, kind: output, shape index: {}]
  %s5 = sld [smem:[#allocation0]]
  $region46: #{tpu_custom_call.1} parent=0
    _
  %s7 = ssub.s32 1, %s5
  %s8 = scalar_select 0, %s7, %s5
  $region1: #{tpu_custom_call.1} parent=0
    #allocation3 [shape = 'u8[8192]{0}', space=vmem, size = 0x2000, scoped, tag = 'input window, operand 0, single buffered']
    #allocation4 [shape = 's32[1]{0}', space=sflag, size = 0x4, scoped, tag = 'scoped memory for tpu_custom_call.1']
    #allocation5 [shape = 's32[1]{0}', space=sflag, size = 0x4, scoped, tag = 'scoped memory for tpu_custom_call.1']
    #allocation6 [shape = 'u8[65536]{0}', space=vmem, size = 0x10000, scoped, tag = 'input window, operand 1, single buffered']
    #allocation7 [shape = 's32[1]{0}', space=sflag, size = 0x4, scoped, tag = 'scoped memory for tpu_custom_call.1']
    #allocation8 [shape = 'u8[65536]{0}', space=vmem, size = 0x10000, scoped, tag = 'input window, operand 2, single buffered']
    #allocation9 [shape = 'u8[8192]{0}', space=vmem, size = 0x2000, scoped, tag = 'output window, operand 0, single buffered']
    %9 = vsyncpa [#allocation4], 0
    %10 = vsyncpa [#allocation7], 0
    %11 = vsyncpa [#allocation5], 0
    // Predicated region
    $region2: #{tpu_custom_call.1} parent=1 // pred_check
      _
    $region3: #{tpu_custom_call.1} parent=1 // pred_check_branch
      %13 = sbr.rel (0) target = $region5
    $region4: #{tpu_custom_call.1} parent=1 // pred_region
      %s15 = ssub.s32 256, 256
      %16 = vsyncadd [#allocation4], %s15
      %s17 = sshll.u32 [#allocation3], 4
      %s18 = int_to_ptr.vmem [resolvable:$true] %s17
      %23 = dma.hbm_to_vmem [thread:$0]  %s0, 256, %s18, [#allocation4], 128, 128, 8
    $region5: #{tpu_custom_call.1} parent=1 // pred_fallthru
      _
    // Predicated region
    $region6: #{tpu_custom_call.1} parent=1 // pred_check
      _
    $region7: #{tpu_custom_call.1} parent=1 // pred_check_branch
      %25 = sbr.rel (0) target = $region9
    $region8: #{tpu_custom_call.1} parent=1 // pred_region
      %s27 = ssub.s32 2048, 2048
      %28 = vsyncadd [#allocation7], %s27
      %s29 = sshll.u32 [#allocation6], 4
      %s30 = int_to_ptr.vmem [resolvable:$true] %s29
      %35 = dma.hbm_to_vmem [thread:$0]  %s1, 2048, %s30, [#allocation7], 128, 128, 8
    $region9: #{tpu_custom_call.1} parent=1 // pred_fallthru
      _
    // Predicated region
    $region10: #{tpu_custom_call.1} parent=1 // pred_check
      _
    $region11: #{tpu_custom_call.1} parent=1 // pred_check_branch
      %37 = sbr.rel (0) target = $region13
    $region12: #{tpu_custom_call.1} parent=1 // pred_region
      %s39 = ssub.s32 2048, 2048
      %40 = vsyncadd [#allocation7], %s39
      %s41 = sshll.u32 [#allocation8], 4
      %s42 = int_to_ptr.vmem [resolvable:$true] %s41
      %47 = dma.hbm_to_vmem [thread:$0]  %s2, 2048, %s42, [#allocation7], 128, 128, 8
    $region13: #{tpu_custom_call.1} parent=1 // pred_fallthru
      _
    // Predicated region
    $region14: #{tpu_custom_call.1} parent=1 // pred_check
      _
    $region15: #{tpu_custom_call.1} parent=1 // pred_check_branch
      %49 = sbr.rel (0) target = $region17
    $region16: #{tpu_custom_call.1} parent=1 // pred_region
      _
    $region17: #{tpu_custom_call.1} parent=1 // pred_fallthru
      _
    // Predicated region
    $region18: #{tpu_custom_call.1} parent=1 // pred_check
      _
    $region19: #{tpu_custom_call.1} parent=1 // pred_check_branch
      %51 = sbr.rel (0) target = $region21
    $region20: #{tpu_custom_call.1} parent=1 // pred_region
      %52 = dma.done [#allocation4], 256
    $region21: #{tpu_custom_call.1} parent=1 // pred_fallthru
      _
    // Predicated region
    $region22: #{tpu_custom_call.1} parent=1 // pred_check
      _
    $region23: #{tpu_custom_call.1} parent=1 // pred_check_branch
      %54 = sbr.rel (0) target = $region25
    $region24: #{tpu_custom_call.1} parent=1 // pred_region
      %55 = dma.done [#allocation7], 2048
    $region25: #{tpu_custom_call.1} parent=1 // pred_fallthru
      _
    // Predicated region
    $region26: #{tpu_custom_call.1} parent=1 // pred_check
      _
    $region27: #{tpu_custom_call.1} parent=1 // pred_check_branch
      %57 = sbr.rel (0) target = $region29
    $region28: #{tpu_custom_call.1} parent=1 // pred_region
      %58 = dma.done [#allocation7], 2048
    $region29: #{tpu_custom_call.1} parent=1 // pred_fallthru
      _
    %p59 = scmp.eq.s32.totalorder 0, 0
    // Predicated region
    $region30: #{tpu_custom_call.1} parent=1 // pred_check
      %p60 = pneg %p59
    $region31: #{tpu_custom_call.1} parent=1 // pred_check_branch
      %62 = sbr.rel (%p60) target = $region33
    $region32: #{tpu_custom_call.1} parent=1 // pred_region
      %63 = vst [vmem:[#allocation2] sm:$0xff] 0.0
      %64 = vst [vmem:[#allocation2 + $0x8] sm:$0xff] 0.0
    $region33: #{tpu_custom_call.1} parent=1 // pred_fallthru
      _
    %v65 = vld [vmem:[#allocation6] sm:$0xff]
    %v66 = vld [vmem:[#allocation6 + $0x8] sm:$0xff]
    %v67 = vld [vmem:[#allocation6 + $0x10] sm:$0xff]
    %v68 = vld [vmem:[#allocation6 + $0x18] sm:$0xff]
    %v69 = vld [vmem:[#allocation6 + $0x20] sm:$0xff]
    %v70 = vld [vmem:[#allocation6 + $0x28] sm:$0xff]
    %v71 = vld [vmem:[#allocation6 + $0x30] sm:$0xff]
    %v72 = vld [vmem:[#allocation6 + $0x38] sm:$0xff]
    %v73 = vld [vmem:[#allocation6 + $0x40] sm:$0xff]
    %v74 = vld [vmem:[#allocation6 + $0x48] sm:$0xff]
    %v75 = vld [vmem:[#allocation6 + $0x50] sm:$0xff]
    %v76 = vld [vmem:[#allocation6 + $0x58] sm:$0xff]
    %v77 = vld [vmem:[#allocation6 + $0x60] sm:$0xff]
    %v78 = vld [vmem:[#allocation6 + $0x68] sm:$0xff]
    %v79 = vld [vmem:[#allocation6 + $0x70] sm:$0xff]
    %v80 = vld [vmem:[#allocation6 + $0x78] sm:$0xff]
    %v81 = vld [vmem:[#allocation8] sm:$0xff]
    %v82 = vld [vmem:[#allocation8 + $0x8] sm:$0xff]
    %v83 = vld [vmem:[#allocation8 + $0x10] sm:$0xff]
    %v84 = vld [vmem:[#allocation8 + $0x18] sm:$0xff]
    %v85 = vld [vmem:[#allocation8 + $0x20] sm:$0xff]
    %v86 = vld [vmem:[#allocation8 + $0x28] sm:$0xff]
    %v87 = vld [vmem:[#allocation8 + $0x30] sm:$0xff]
    %v88 = vld [vmem:[#allocation8 + $0x38] sm:$0xff]
    %v89 = vld [vmem:[#allocation8 + $0x40] sm:$0xff]
    %v90 = vld [vmem:[#allocation8 + $0x48] sm:$0xff]
    %v91 = vld [vmem:[#allocation8 + $0x50] sm:$0xff]
    %v92 = vld [vmem:[#allocation8 + $0x58] sm:$0xff]
    %v93 = vld [vmem:[#allocation8 + $0x60] sm:$0xff]
    %v94 = vld [vmem:[#allocation8 + $0x68] sm:$0xff]
    %v95 = vld [vmem:[#allocation8 + $0x70] sm:$0xff]
    %v96 = vld [vmem:[#allocation8 + $0x78] sm:$0xff]
    %v97 = vmul.f32 %v65, %v81
    %v98 = vmul.f32 %v66, %v82
    %v99 = vmul.f32 %v67, %v83
    %v100 = vmul.f32 %v68, %v84
    %v101 = vmul.f32 %v69, %v85
    %v102 = vmul.f32 %v70, %v86
    %v103 = vmul.f32 %v71, %v87
    %v104 = vmul.f32 %v72, %v88
    %v105 = vmul.f32 %v73, %v89
    %v106 = vmul.f32 %v74, %v90
    %v107 = vmul.f32 %v75, %v91
    %v108 = vmul.f32 %v76, %v92
    %v109 = vmul.f32 %v77, %v93
    %v110 = vmul.f32 %v78, %v94
    %v111 = vmul.f32 %v79, %v95
    %v112 = vmul.f32 %v80, %v96
    %v113 = vld [vmem:[#allocation2] sm:$0xff]
    %v114 = vld [vmem:[#allocation2 + $0x8] sm:$0xff]
    %v115 = vld [vmem:[#allocation3] sm:$0xff]
    %v116 = vld [vmem:[#allocation3 + $0x8] sm:$0xff]
    %117 = vmatprep.subr.mxu0 0.0
    %118 = vmatpush1.msra.mxu0 %v112
    %119 = vmatprep.subr.mxu0 0.0
    %120 = vmatpush1.msra.mxu0 %v111
    %121 = vmatprep.subr.mxu0 0.0
    %122 = vmatpush1.msra.mxu0 %v110
    %123 = vmatprep.subr.mxu0 0.0
    %124 = vmatpush1.msra.mxu0 %v109
    %125 = vmatprep.subr.mxu0 0.0
    %126 = vmatpush1.msra.mxu0 %v108
    %127 = vmatprep.subr.mxu0 0.0
    %128 = vmatpush1.msra.mxu0 %v107
    %129 = vmatprep.subr.mxu0 0.0
    %130 = vmatpush1.msra.mxu0 %v106
    %131 = vmatprep.subr.mxu0 0.0
    %132 = vmatpush1.msra.mxu0 %v105
    %133 = vmatprep.subr.mxu0 0.0
    %134 = vmatpush1.msra.mxu0 %v104
    %135 = vmatprep.subr.mxu0 0.0
    %136 = vmatpush1.msra.mxu0 %v103
    %137 = vmatprep.subr.mxu0 0.0
    %138 = vmatpush1.msra.mxu0 %v102
    %139 = vmatprep.subr.mxu0 0.0
    %140 = vmatpush1.msra.mxu0 %v101
    %141 = vmatprep.subr.mxu0 0.0
    %142 = vmatpush1.msra.mxu0 %v100
    %143 = vmatprep.subr.mxu0 0.0
    %144 = vmatpush1.msra.mxu0 %v99
    %145 = vmatprep.subr.mxu0 0.0
    %146 = vmatpush1.msra.mxu0 %v98
    %147 = vmatprep.subr.mxu0 0.0
    %148 = vmatpush1.msra.mxu0 %v97
    %149 = vmatprep.subr.mxu0 0.0
    %150 = vmatpush2.msra.mxu0 0.0
    %151 = vmatprep.subr.mxu0 0.0
    %152 = vmatpush2.msra.mxu0 0.0
    %153 = vmatprep.subr.mxu0 0.0
    %154 = vmatpush2.msra.mxu0 0.0
    %155 = vmatprep.subr.mxu0 0.0
    %156 = vmatpush2.msra.mxu0 0.0
    %157 = vmatprep.subr.mxu0 0.0
    %158 = vmatpush2.msra.mxu0 0.0
    %159 = vmatprep.subr.mxu0 0.0
    %160 = vmatpush2.msra.mxu0 0.0
    %161 = vmatprep.subr.mxu0 0.0
    %162 = vmatpush2.msra.mxu0 0.0
    %163 = vmatprep.subr.mxu0 0.0
    %164 = vmatpush2.msra.mxu0 0.0
    %165 = vmatprep.subr.mxu0 0.0
    %166 = vmatpush2.msra.mxu0 0.0
    %167 = vmatprep.subr.mxu0 0.0
    %168 = vmatpush2.msra.mxu0 0.0
    %169 = vmatprep.subr.mxu0 0.0
    %170 = vmatpush2.msra.mxu0 0.0
    %171 = vmatprep.subr.mxu0 0.0
    %172 = vmatpush2.msra.mxu0 0.0
    %173 = vmatprep.subr.mxu0 0.0
    %174 = vmatpush2.msra.mxu0 0.0
    %175 = vmatprep.subr.mxu0 0.0
    %176 = vmatpush2.msra.mxu0 0.0
    %177 = vmatprep.subr.mxu0 0.0
    %178 = vmatpush2.msra.mxu0 0.0
    %179 = vmatprep.subr.mxu0 0.0
    %180 = vmatpush2.msra.mxu0 0.0
    %181 = vmatprep.mubr.f32.mxu0 0.0
    %182 = vmatmul.mubr.f32.gmra.mxu0 %v115
    %v183 = vpop.f32.mrf.mxu0
    %v184 = vadd.f32 0.0, %v183
    %v185 = vpop.f32.mrf.mxu0
    %186 = vmatprep.mubr.f32.mxu0 0.0
    %187 = vmatmul.mubr.f32.gmra.mxu0 %v116
    %v188 = vpop.f32.mrf.mxu0
    %v189 = vadd.f32 0.0, %v188
    %v190 = vpop.f32.mrf.mxu0
    %191 = vdwg.mxu0
    %v192 = vadd.f32 %v113, %v184
    %v193 = vadd.f32 %v114, %v189
    %194 = vst [vmem:[#allocation2] sm:$0xff] %v192
    %195 = vst [vmem:[#allocation2 + $0x8] sm:$0xff] %v193
    // Predicated region
    $region34: #{tpu_custom_call.1} parent=1 // pred_check
      %p196 = pneg %p59
    $region35: #{tpu_custom_call.1} parent=1 // pred_check_branch
      %198 = sbr.rel (%p196) target = $region37
    $region36: #{tpu_custom_call.1} parent=1 // pred_region
      %v199 = vld [vmem:[#allocation2] sm:$0xff]
      %v200 = vld [vmem:[#allocation2 + $0x8] sm:$0xff]
      %v201 = vld [vmem:[%s3] sm:$0x1]
      %v203 = vlaneseq
      %v204 = vshrl.u32 %v203, 7
      %v205 = vsub.s32 0, %v204
      %v206 = vrot.slane %v201, %v205
      %v208 = vadd.f32 %v199, %v206
      %v209 = vadd.f32 %v200, %v206
      %210 = vst [vmem:[#allocation9] sm:$0xff] %v208
      %211 = vst [vmem:[#allocation9 + $0x8] sm:$0xff] %v209
    $region37: #{tpu_custom_call.1} parent=1 // pred_fallthru
      _
    // Predicated region
    $region38: #{tpu_custom_call.1} parent=1 // pred_check
      _
    $region39: #{tpu_custom_call.1} parent=1 // pred_check_branch
      %213 = sbr.rel (0) target = $region41
    $region40: #{tpu_custom_call.1} parent=1 // pred_region
      %s215 = ssub.s32 256, 256
      %216 = vsyncadd [#allocation5], %s215
      %s217 = sshll.u32 [#allocation9], 4
      %s218 = int_to_ptr.vmem [resolvable:$true] %s217
      %223 = dma.vmem_to_hbm [thread:$0]  %s218, 256, %s4, [#allocation5], 128, 128, 8
    $region41: #{tpu_custom_call.1} parent=1 // pred_fallthru
      _
    // Predicated region
    $region42: #{tpu_custom_call.1} parent=1 // pred_check
      _
    $region43: #{tpu_custom_call.1} parent=1 // pred_check_branch
      %225 = sbr.rel (0) target = $region45
    $region44: #{tpu_custom_call.1} parent=1 // pred_region
      %226 = dma.done [#allocation5], 256
    $region45: #{tpu_custom_call.1} parent=1 // pred_fallthru
      _
    %227 = vsyncpa [#allocation4], 1
    %228 = vsyncpa [#allocation7], 1
    %229 = vsyncpa [#allocation5], 1

</llo_original>
